<compile_context>
chip_gen: v5e
topology: v5e:2x2
jax: 0.10.0
libtpu: 0.0.40
codegen_flags: <defaults>
</compile_context>

<pallas_src>
import jax
import jax.numpy as jnp
from jax.experimental import pallas as pl
from jax.experimental.pallas import tpu as pltpu

LANE = 128        # output-column padding granularity (lane width)
HID_ALIGN = 256   # hidden padding granularity (full 256-wide MXU pass on v6e/v7x)
HID_CHUNK = 256   # per-chunk hidden width inside the kernel


def _round_up(v, m):
    return ((v + m - 1) // m) * m


def two_layer_kernel(x_ref, w1_ref, b1_ref, w2_ref, b2_ref, o_ref):
    """y = relu(x @ W1 + b1) @ W2 + b2 with the hidden dim in 256-wide chunks.

    W1 is (D_in, Hp) and W2 is (Hp, Dp) -- transposed/padded once at init, so
    both matmuls are canonical (M,K)x(K,N) MXU ops with f32 accumulation.
    """
    x = x_ref[...]
    hp = w1_ref.shape[1]
    n_chunks = hp // HID_CHUNK              # static (Hp is a multiple of 256)
    acc = jnp.zeros((x.shape[0], o_ref.shape[1]), jnp.float32)
    for c in range(n_chunks):               # static unroll; bounds h temp to (tm, 256)
        lo = c * HID_CHUNK
        hi = lo + HID_CHUNK
        h = jnp.dot(x, w1_ref[:, lo:hi], preferred_element_type=jnp.float32)
        h = jnp.maximum(h + b1_ref[:, lo:hi].astype(jnp.float32), 0.0)
        acc = acc + jnp.dot(h.astype(w2_ref.dtype), w2_ref[lo:hi, :],
                            preferred_element_type=jnp.float32)
    o_ref[...] = (acc + b2_ref[...].astype(jnp.float32)).astype(o_ref.dtype)


def prepare_params(w1, b1, w2, b2, *, param_dtype=jnp.float32):
    """One-time parameter preparation (init-time, NOT per forward).

    * Transposes nn.Linear (out, in) weights into MXU-canonical (in, out).
    * Zero-pads H up to a multiple of 256 and D_out up to a multiple of 128 so
      the hidden activation and output tiles are lane-dense. Padding is exact:
      relu(0) = 0 and padded output columns are zero, sliced off after the call.
    * param_dtype=jnp.bfloat16 is recommended at production sizes on v6e/v7x
      (mandatory-ish on v7x's 64 MiB VMEM); biases stay f32.
    """
    H, D_in = w1.shape
    D_out = w2.shape[0]
    Hp = _round_up(H, HID_ALIGN)
    Dp = _round_up(D_out, LANE)

    w1p = jnp.zeros((D_in, Hp), param_dtype).at[:, :H].set(w1.T.astype(param_dtype))
    b1p = jnp.zeros((1, Hp), jnp.float32).at[0, :H].set(b1.astype(jnp.float32))
    w2p = jnp.zeros((Hp, Dp), param_dtype).at[:H, :D_out].set(w2.T.astype(param_dtype))
    b2p = jnp.zeros((1, Dp), jnp.float32).at[0, :D_out].set(b2.astype(jnp.float32))
    return {"w1": w1p, "b1": b1p, "w2": w2p, "b2": b2p, "d_out": D_out}


def _vmem_limit_bytes(tm, d_in, hp, dp, x_itemsize, w_itemsize):
    resident = (d_in * hp + hp * dp) * w_itemsize + (hp + dp) * 4   # single-buffered weights + biases
    streamed = 2 * tm * (d_in + dp) * x_itemsize                    # double-buffered x / out tiles
    temps = tm * HID_CHUNK * 4 + tm * dp * 4                        # hidden chunk + f32 accumulator
    needed = resident + streamed + temps
    # Floor at 32 MiB (harmless), cap at 64 MiB (safe on every generation:
    # v7x physical VMEM is 64 MiB; v5e/v6e have 128 MiB).
    return int(min(max(needed + needed // 4 + (4 << 20), 32 << 20), 64 << 20))


def two_layer_net(x, params, *, tm=512):
    """Fused forward: y = relu(x @ W1 + b1) @ W2 + b2.

    x: (N, D_in). params: output of prepare_params().
      N <= tm : single grid-less call (everything VMEM-resident, zero per-step overhead).
      N  > tm : batch-tiled grid; weights/biases are VMEM-resident and
                single-buffered, x/out tiles are pipelined, batch axis is
                "parallel" (megacore sharding on v7x).
    tm tuning: ~1024 on v5e/v6e (128 MiB VMEM), 256-512 on v7x (64 MiB VMEM);
    keep N/tm >= 2 on v7x so both TensorCores get comparable work.
    """
    w1, b1, w2, b2 = params["w1"], params["b1"], params["w2"], params["b2"]
    d_out = params["d_out"]
    N, D_in = x.shape
    Hp = w1.shape[1]
    Dp = w2.shape[1]
    if w1.dtype != jnp.float32:
        x = x.astype(w1.dtype)   # bf16 path: stream x at the weight dtype

    vmem_limit = _vmem_limit_bytes(min(tm, N), D_in, Hp, Dp,
                                   x.dtype.itemsize, w1.dtype.itemsize)

    if N <= tm:
        y_pad = pl.pallas_call(
            two_layer_kernel,
            out_shape=jax.ShapeDtypeStruct((N, Dp), x.dtype),
            in_specs=[pl.BlockSpec(memory_space=pltpu.MemorySpace.VMEM)] * 5,
            out_specs=pl.BlockSpec(memory_space=pltpu.MemorySpace.VMEM),
            compiler_params=pltpu.CompilerParams(vmem_limit_bytes=vmem_limit),
        )(x, w1, b1, w2, b2)
    else:
        resident = pl.Buffered(1)   # loop-invariant blocks: no double buffer
        grid = (pl.cdiv(N, tm),)
        # TODO(synk): if (D_in*Hp + Hp*Dp)*itemsize outgrows scoped VMEM, add a
        # hidden-axis (k-tiled) grid fallback with a pl.when-guarded accumulator.
        y_pad = pl.pallas_call(
            two_layer_kernel,
            out_shape=jax.ShapeDtypeStruct((N, Dp), x.dtype),
            grid=grid,
            in_specs=[
                pl.BlockSpec((tm, D_in), lambda i: (i, 0)),                          # x tile, pipelined
                pl.BlockSpec((D_in, Hp), lambda i: (0, 0), pipeline_mode=resident),  # W1 (in, hid)
                pl.BlockSpec((1, Hp), lambda i: (0, 0), pipeline_mode=resident),     # b1
                pl.BlockSpec((Hp, Dp), lambda i: (0, 0), pipeline_mode=resident),    # W2 (hid, out)
                pl.BlockSpec((1, Dp), lambda i: (0, 0), pipeline_mode=resident),     # b2
            ],
            out_specs=pl.BlockSpec((tm, Dp), lambda i: (i, 0)),
            compiler_params=pltpu.CompilerParams(
                dimension_semantics=("parallel",),
                vmem_limit_bytes=vmem_limit,
            ),
        )(x, w1, b1, w2, b2)

    # Drop the lane-padding columns (padded outputs are exactly zero).
    return y_pad[:, :d_out]


if __name__ == "__main__":
    # Shapes implied by the module: x (N, D_in), hidden H, output D_out.
    N, D_in, H, D_out = 8, 32, 64, 16

    key = jax.random.PRNGKey(0)
    kx, k1, k2, k3, k4, kx2 = jax.random.split(key, 6)

    x = jax.random.normal(kx, (N, D_in), dtype=jnp.float32)
    # Deterministic parameter init (synthetic, same shapes as nn.Linear).
    w1 = jax.random.normal(k1, (H, D_in), dtype=jnp.float32) * 0.1
    b1 = jax.random.normal(k2, (H,), dtype=jnp.float32) * 0.1
    w2 = jax.random.normal(k3, (D_out, H), dtype=jnp.float32) * 0.1
    b2 = jax.random.normal(k4, (D_out,), dtype=jnp.float32) * 0.1

    # One-time prep (analogous to module __init__): transpose + pad to
    # MXU-canonical, lane-dense layout.
    params = prepare_params(w1, b1, w2, b2)

    # Small-N (grid-less) path.
    y = two_layer_net(x, params)
    jax.block_until_ready(y)
    y_ref = jnp.maximum(x @ w1.T + b1, 0.0) @ w2.T + b2
    assert y.shape == (N, D_out)
    assert jnp.allclose(y, y_ref, atol=1e-5, rtol=1e-5)

    # Batch-tiled grid path (small tm override just to exercise the pipeline,
    # single-buffered weights, and the parallel batch axis).
    N2 = 64
    x2 = jax.random.normal(kx2, (N2, D_in), dtype=jnp.float32)
    y2 = two_layer_net(x2, params, tm=16)
    jax.block_until_ready(y2)
    y2_ref = jnp.maximum(x2 @ w1.T + b1, 0.0) @ w2.T + b2
    assert y2.shape == (N2, D_out)
    assert jnp.allclose(y2, y2_ref, atol=1e-5, rtol=1e-5)

    print("KERNEL_OK")
</pallas_src>

<mosaic_0001>
module attributes {stable_mosaic.version = 11 : i64} {
  func.func @two_layer_kernel(%arg0: memref<8x32xf32, #tpu.memory_space<vmem>>, %arg1: memref<32x256xf32, #tpu.memory_space<vmem>>, %arg2: memref<1x256xf32, #tpu.memory_space<vmem>>, %arg3: memref<256x128xf32, #tpu.memory_space<vmem>>, %arg4: memref<1x128xf32, #tpu.memory_space<vmem>>, %arg5: memref<8x128xf32, #tpu.memory_space<vmem>>) attributes {dimension_semantics = [], scalar_prefetch = 0 : i64, scratch_operands = 0 : i64, tpu.core_type = #tpu.core_type<tc>} {
    %c0 = arith.constant 0 : index
    %c0_0 = arith.constant 0 : index
    %0 = vector.load %arg0[%c0, %c0_0] : memref<8x32xf32, #tpu.memory_space<vmem>>, vector<8x32xf32>
    %cst = arith.constant 0.000000e+00 : f32
    %1 = vector.broadcast %cst : f32 to vector<8x128xf32>
    %c0_1 = arith.constant 0 : index
    %c0_2 = arith.constant 0 : index
    %2 = vector.load %arg1[%c0_1, %c0_2] : memref<32x256xf32, #tpu.memory_space<vmem>>, vector<32x256xf32>
    %cst_3 = arith.constant dense<0.000000e+00> : vector<8x256xf32>
    %3 = tpu.matmul %0, %2, %cst_3 {dimension_numbers = #tpu.dot_dimension_numbers<[1], [0], [0], [1], [0, 0, 1, 1], [], []>} : vector<8x32xf32>, vector<32x256xf32>, vector<8x256xf32> -> vector<8x256xf32>
    %c0_4 = arith.constant 0 : index
    %c0_5 = arith.constant 0 : index
    %4 = vector.load %arg2[%c0_4, %c0_5] : memref<1x256xf32, #tpu.memory_space<vmem>>, vector<1x256xf32>
    %5 = vector.broadcast %4 : vector<1x256xf32> to vector<8x256xf32>
    %6 = arith.addf %3, %5 : vector<8x256xf32>
    %cst_6 = arith.constant 0.000000e+00 : f32
    %7 = vector.broadcast %cst_6 : f32 to vector<8x256xf32>
    %8 = arith.maximumf %6, %7 : vector<8x256xf32>
    %c0_7 = arith.constant 0 : index
    %c0_8 = arith.constant 0 : index
    %9 = vector.load %arg3[%c0_7, %c0_8] : memref<256x128xf32, #tpu.memory_space<vmem>>, vector<256x128xf32>
    %cst_9 = arith.constant dense<0.000000e+00> : vector<8x128xf32>
    %10 = tpu.matmul %8, %9, %cst_9 {dimension_numbers = #tpu.dot_dimension_numbers<[1], [0], [0], [1], [0, 0, 1, 1], [], []>} : vector<8x256xf32>, vector<256x128xf32>, vector<8x128xf32> -> vector<8x128xf32>
    %11 = arith.addf %1, %10 : vector<8x128xf32>
    %c0_10 = arith.constant 0 : index
    %c0_11 = arith.constant 0 : index
    %12 = vector.load %arg4[%c0_10, %c0_11] : memref<1x128xf32, #tpu.memory_space<vmem>>, vector<1x128xf32>
    %13 = vector.broadcast %12 : vector<1x128xf32> to vector<8x128xf32>
    %14 = arith.addf %11, %13 : vector<8x128xf32>
    %c0_12 = arith.constant 0 : index
    %c0_13 = arith.constant 0 : index
    %15 = vector.load %arg5[%c0_12, %c0_13] : memref<8x128xf32, #tpu.memory_space<vmem>>, vector<8x128xf32>
    tpu.vector_store %arg5[%c0_12, %c0_13], %14 {strides = array<i32>} : memref<8x128xf32, #tpu.memory_space<vmem>>, vector<8x128xf32>,
    return
  }
}

</mosaic_0001>

<llo_original>
// kernel: tpu_custom_call.1
$region0: #{tpu_custom_call.1}
  #allocation0 [shape = 'u32[]', space=smem, size = 0x4, offset = 0x4, fixed_abs, tag = 'smem constant byte address 0x4 - core index']
  #allocation1 [shape = 'u32[72,128]{1,0:T(1,128)}', space=vmem, size = 0x9000, scoped, tag = 'internal scratch']
  %s0 = inlined_call_operand.hbm [shape: f32[8,32], index: 0, kind: input, shape index: {}]
  %s1 = inlined_call_operand.hbm [shape: f32[32,256], index: 1, kind: input, shape index: {}]
  %s2 = inlined_call_operand.hbm [shape: f32[1,256], index: 2, kind: input, shape index: {}]
  %s3 = inlined_call_operand.hbm [shape: f32[256,128], index: 3, kind: input, shape index: {}]
  %s4 = inlined_call_operand.vmem [shape: f32[1,128], index: 4, kind: input, shape index: {}]
  %s5 = inlined_call_operand.hbm [shape: f32[8,128], index: 5, kind: output, shape index: {}]
  %s6 = sld [smem:[#allocation0]]
  $region46: #{tpu_custom_call.1} parent=0
    _
  %s8 = ssub.s32 1, %s6
  %s9 = scalar_select 0, %s8, %s6
  $region1: #{tpu_custom_call.1} parent=0
    #allocation2 [shape = 'u8[4096]{0}', space=vmem, size = 0x1000, scoped, tag = 'input window, operand 0, single buffered']
    #allocation3 [shape = 's32[1]{0}', space=sflag, size = 0x4, scoped, tag = 'scoped memory for tpu_custom_call.1']
    #allocation4 [shape = 's32[1]{0}', space=sflag, size = 0x4, scoped, tag = 'scoped memory for tpu_custom_call.1']
    #allocation5 [shape = 'u8[32768]{0}', space=vmem, size = 0x8000, scoped, tag = 'input window, operand 1, single buffered']
    #allocation6 [shape = 's32[1]{0}', space=sflag, size = 0x4, scoped, tag = 'scoped memory for tpu_custom_call.1']
    #allocation7 [shape = 'u8[1024]{0}', space=vmem, size = 0x400, scoped, tag = 'input window, operand 2, single buffered']
    #allocation8 [shape = 'u8[131072]{0}', space=vmem, size = 0x20000, scoped, tag = 'input window, operand 3, single buffered']
    #allocation9 [shape = 's32[1]{0}', space=sflag, size = 0x4, scoped, tag = 'scoped memory for tpu_custom_call.1']
    #allocation10 [shape = 'u8[4096]{0}', space=vmem, size = 0x1000, scoped, tag = 'output window, operand 0, single buffered']
    %10 = vsyncpa [#allocation3], 0
    %11 = vsyncpa [#allocation6], 0
    %12 = vsyncpa [#allocation9], 0
    %13 = vsyncpa [#allocation4], 0
    // Predicated region
    $region2: #{tpu_custom_call.1} parent=1 // pred_check
      _
    $region3: #{tpu_custom_call.1} parent=1 // pred_check_branch
      %15 = sbr.rel (0) target = $region5
    $region4: #{tpu_custom_call.1} parent=1 // pred_region
      %17 = vsyncadd [#allocation3], 0
      %s19 = sshll.u32 %s0, 4
      %s20 = int_to_ptr.hbm [resolvable:$true] %s19
      %s21 = sshll.u32 [#allocation2], 4
      %s22 = int_to_ptr.vmem [resolvable:$true] %s21
      %24 = dma.hbm_to_vmem [thread:$0]  %s20, 128, %s22, [#allocation3]
    $region5: #{tpu_custom_call.1} parent=1 // pred_fallthru
      _
    // Predicated region
    $region6: #{tpu_custom_call.1} parent=1 // pred_check
      _
    $region7: #{tpu_custom_call.1} parent=1 // pred_check_branch
      %26 = sbr.rel (0) target = $region9
    $region8: #{tpu_custom_call.1} parent=1 // pred_region
      %28 = vsyncadd [#allocation6], 0
      %s29 = sshll.u32 %s1, 4
      %s30 = int_to_ptr.hbm [resolvable:$true] %s29
      %s31 = sshll.u32 [#allocation5], 4
      %s32 = int_to_ptr.vmem [resolvable:$true] %s31
      %37 = dma.hbm_to_vmem [thread:$0]  %s30, 1024, %s32, [#allocation6], 256, 256, 16
    $region9: #{tpu_custom_call.1} parent=1 // pred_fallthru
      _
    // Predicated region
    $region10: #{tpu_custom_call.1} parent=1 // pred_check
      _
    $region11: #{tpu_custom_call.1} parent=1 // pred_check_branch
      %39 = sbr.rel (0) target = $region13
    $region12: #{tpu_custom_call.1} parent=1 // pred_region
      %41 = vsyncadd [#allocation6], 0
      %s43 = sshll.u32 %s2, 4
      %s44 = int_to_ptr.hbm [resolvable:$true] %s43
      %s45 = sshll.u32 [#allocation7], 4
      %s46 = int_to_ptr.vmem [resolvable:$true] %s45
      %48 = dma.hbm_to_vmem [thread:$0]  %s44, 32, %s46, [#allocation6]
    $region13: #{tpu_custom_call.1} parent=1 // pred_fallthru
      _
    // Predicated region
    $region14: #{tpu_custom_call.1} parent=1 // pred_check
      _
    $region15: #{tpu_custom_call.1} parent=1 // pred_check_branch
      %50 = sbr.rel (0) target = $region17
    $region16: #{tpu_custom_call.1} parent=1 // pred_region
      %52 = vsyncadd [#allocation9], 0
      %s53 = sshll.u32 %s3, 4
      %s54 = int_to_ptr.hbm [resolvable:$true] %s53
      %s55 = sshll.u32 [#allocation8], 4
      %s56 = int_to_ptr.vmem [resolvable:$true] %s55
      %61 = dma.hbm_to_vmem [thread:$0]  %s54, 4096, %s56, [#allocation9], 128, 128, 8
    $region17: #{tpu_custom_call.1} parent=1 // pred_fallthru
      _
    // Predicated region
    $region18: #{tpu_custom_call.1} parent=1 // pred_check
      _
    $region19: #{tpu_custom_call.1} parent=1 // pred_check_branch
      %63 = sbr.rel (0) target = $region21
    $region20: #{tpu_custom_call.1} parent=1 // pred_region
      _
    $region21: #{tpu_custom_call.1} parent=1 // pred_fallthru
      _
    // Predicated region
    $region22: #{tpu_custom_call.1} parent=1 // pred_check
      _
    $region23: #{tpu_custom_call.1} parent=1 // pred_check_branch
      %65 = sbr.rel (0) target = $region25
    $region24: #{tpu_custom_call.1} parent=1 // pred_region
      %67 = dma.done [#allocation3], 128
    $region25: #{tpu_custom_call.1} parent=1 // pred_fallthru
      _
    // Predicated region
    $region26: #{tpu_custom_call.1} parent=1 // pred_check
      _
    $region27: #{tpu_custom_call.1} parent=1 // pred_check_branch
      %69 = sbr.rel (0) target = $region29
    $region28: #{tpu_custom_call.1} parent=1 // pred_region
      %71 = dma.done [#allocation6], 1024
    $region29: #{tpu_custom_call.1} parent=1 // pred_fallthru
      _
    // Predicated region
    $region30: #{tpu_custom_call.1} parent=1 // pred_check
      _
    $region31: #{tpu_custom_call.1} parent=1 // pred_check_branch
      %73 = sbr.rel (0) target = $region33
    $region32: #{tpu_custom_call.1} parent=1 // pred_region
      %75 = dma.done [#allocation6], 32
    $region33: #{tpu_custom_call.1} parent=1 // pred_fallthru
      _
    // Predicated region
    $region34: #{tpu_custom_call.1} parent=1 // pred_check
      _
    $region35: #{tpu_custom_call.1} parent=1 // pred_check_branch
      %77 = sbr.rel (0) target = $region37
    $region36: #{tpu_custom_call.1} parent=1 // pred_region
      %79 = dma.done [#allocation9], 4096
    $region37: #{tpu_custom_call.1} parent=1 // pred_fallthru
      _
    %v80 = vld [vmem:[#allocation2] sm:$0xff]
    %v81 = vld [vmem:[#allocation5] sm:$0xff]
    %v82 = vld [vmem:[#allocation5 + $0x8] sm:$0xff]
    %v83 = vld [vmem:[#allocation5 + $0x10] sm:$0xff]
    %v84 = vld [vmem:[#allocation5 + $0x18] sm:$0xff]
    %v85 = vld [vmem:[#allocation5 + $0x20] sm:$0xff]
    %v86 = vld [vmem:[#allocation5 + $0x28] sm:$0xff]
    %v87 = vld [vmem:[#allocation5 + $0x30] sm:$0xff]
    %v88 = vld [vmem:[#allocation5 + $0x38] sm:$0xff]
    %v89 = vld [vmem:[#allocation7] sm:$0x3]
    %v91 = vperm.slane %v89, 0
    %v92 = vperm.slane %v89, 1
    %vm95 = vcmask 261120
    %v97 = vsel %vm95, %v80, 0
    %99 = vmatpush.msra.mxu0 0.0
    %100 = vmatpush.msra.mxu0 0.0
    %101 = vmatpush.msra.mxu0 0.0
    %102 = vmatpush.msra.mxu0 0.0
    %103 = vmatpush.msra.mxu0 0.0
    %104 = vmatpush.msra.mxu0 0.0
    %105 = vmatpush.msra.mxu0 0.0
    %106 = vmatpush.msra.mxu0 0.0
    %107 = vmatpush.msra.mxu0 0.0
    %108 = vmatpush.msra.mxu0 0.0
    %109 = vmatpush.msra.mxu0 0.0
    %110 = vmatpush.msra.mxu0 0.0
    %111 = vmatpush.msra.mxu0 %v87
    %112 = vmatpush.msra.mxu0 %v85
    %113 = vmatpush.msra.mxu0 %v83
    %114 = vmatpush.msra.mxu0 %v81
    %115 = vmatmul.f32.gmra.mxu0 %v97
    %v116 = vpop.f32.mrf.mxu0
    %v117 = vadd.f32 %v91, %v116
    %118 = vdwg.mxu0
    %119 = vmatpush.msra.mxu0 0.0
    %120 = vmatpush.msra.mxu0 0.0
    %121 = vmatpush.msra.mxu0 0.0
    %122 = vmatpush.msra.mxu0 0.0
    %123 = vmatpush.msra.mxu0 0.0
    %124 = vmatpush.msra.mxu0 0.0
    %125 = vmatpush.msra.mxu0 0.0
    %126 = vmatpush.msra.mxu0 0.0
    %127 = vmatpush.msra.mxu0 0.0
    %128 = vmatpush.msra.mxu0 0.0
    %129 = vmatpush.msra.mxu0 0.0
    %130 = vmatpush.msra.mxu0 0.0
    %131 = vmatpush.msra.mxu0 %v88
    %132 = vmatpush.msra.mxu0 %v86
    %133 = vmatpush.msra.mxu0 %v84
    %134 = vmatpush.msra.mxu0 %v82
    %135 = vmatmul.f32.gmra.mxu0 %v97
    %v136 = vpop.f32.mrf.mxu0
    %v137 = vadd.f32 %v92, %v136
    %138 = vdwg.mxu0
    %v139 = vmax.f32 %v117, 0.0
    %v140 = vmax.f32 %v137, 0.0
    %v141 = vld [vmem:[#allocation8] sm:$0xff]
    %v142 = vld [vmem:[#allocation8 + $0x8] sm:$0xff]
    %v143 = vld [vmem:[#allocation8 + $0x10] sm:$0xff]
    %v144 = vld [vmem:[#allocation8 + $0x18] sm:$0xff]
    %v145 = vld [vmem:[#allocation8 + $0x20] sm:$0xff]
    %v146 = vld [vmem:[#allocation8 + $0x28] sm:$0xff]
    %v147 = vld [vmem:[#allocation8 + $0x30] sm:$0xff]
    %v148 = vld [vmem:[#allocation8 + $0x38] sm:$0xff]
    %v149 = vld [vmem:[#allocation8 + $0x40] sm:$0xff]
    %v150 = vld [vmem:[#allocation8 + $0x48] sm:$0xff]
    %v151 = vld [vmem:[#allocation8 + $0x50] sm:$0xff]
    %v152 = vld [vmem:[#allocation8 + $0x58] sm:$0xff]
    %v153 = vld [vmem:[#allocation8 + $0x60] sm:$0xff]
    %v154 = vld [vmem:[#allocation8 + $0x68] sm:$0xff]
    %v155 = vld [vmem:[#allocation8 + $0x70] sm:$0xff]
    %v156 = vld [vmem:[#allocation8 + $0x78] sm:$0xff]
    %v157 = vld [vmem:[#allocation8 + $0x80] sm:$0xff]
    %v158 = vld [vmem:[#allocation8 + $0x88] sm:$0xff]
    %v159 = vld [vmem:[#allocation8 + $0x90] sm:$0xff]
    %v160 = vld [vmem:[#allocation8 + $0x98] sm:$0xff]
    %v161 = vld [vmem:[#allocation8 + $0xa0] sm:$0xff]
    %v162 = vld [vmem:[#allocation8 + $0xa8] sm:$0xff]
    %v163 = vld [vmem:[#allocation8 + $0xb0] sm:$0xff]
    %v164 = vld [vmem:[#allocation8 + $0xb8] sm:$0xff]
    %v165 = vld [vmem:[#allocation8 + $0xc0] sm:$0xff]
    %v166 = vld [vmem:[#allocation8 + $0xc8] sm:$0xff]
    %v167 = vld [vmem:[#allocation8 + $0xd0] sm:$0xff]
    %v168 = vld [vmem:[#allocation8 + $0xd8] sm:$0xff]
    %v169 = vld [vmem:[#allocation8 + $0xe0] sm:$0xff]
    %v170 = vld [vmem:[#allocation8 + $0xe8] sm:$0xff]
    %v171 = vld [vmem:[#allocation8 + $0xf0] sm:$0xff]
    %v172 = vld [vmem:[#allocation8 + $0xf8] sm:$0xff]
    %v173 = vld [vmem:[%s4] sm:$0x1]
    %v175 = vperm.slane %v173, 0
    %177 = vmatpush.msra.mxu0 %v156
    %178 = vmatpush.msra.mxu0 %v155
    %179 = vmatpush.msra.mxu0 %v154
    %180 = vmatpush.msra.mxu0 %v153
    %181 = vmatpush.msra.mxu0 %v152
    %182 = vmatpush.msra.mxu0 %v151
    %183 = vmatpush.msra.mxu0 %v150
    %184 = vmatpush.msra.mxu0 %v149
    %185 = vmatpush.msra.mxu0 %v148
    %186 = vmatpush.msra.mxu0 %v147
    %187 = vmatpush.msra.mxu0 %v146
    %188 = vmatpush.msra.mxu0 %v145
    %189 = vmatpush.msra.mxu0 %v144
    %190 = vmatpush.msra.mxu0 %v143
    %191 = vmatpush.msra.mxu0 %v142
    %192 = vmatpush.msra.mxu0 %v141
    %193 = vmatmul.f32.gmra.mxu0 %v139
    %v194 = vpop.f32.mrf.mxu0
    %v195 = vadd.f32 %v175, %v194
    %196 = vdwg.mxu0
    %197 = vmatpush.msra.mxu0 %v172
    %198 = vmatpush.msra.mxu0 %v171
    %199 = vmatpush.msra.mxu0 %v170
    %200 = vmatpush.msra.mxu0 %v169
    %201 = vmatpush.msra.mxu0 %v168
    %202 = vmatpush.msra.mxu0 %v167
    %203 = vmatpush.msra.mxu0 %v166
    %204 = vmatpush.msra.mxu0 %v165
    %205 = vmatpush.msra.mxu0 %v164
    %206 = vmatpush.msra.mxu0 %v163
    %207 = vmatpush.msra.mxu0 %v162
    %208 = vmatpush.msra.mxu0 %v161
    %209 = vmatpush.msra.mxu0 %v160
    %210 = vmatpush.msra.mxu0 %v159
    %211 = vmatpush.msra.mxu0 %v158
    %212 = vmatpush.msra.mxu0 %v157
    %213 = vmatmul.f32.gmra.mxu0 %v140
    %v214 = vpop.f32.mrf.mxu0
    %v215 = vadd.f32 %v195, %v214
    %216 = vdwg.mxu0
    %217 = vst [vmem:[#allocation10] sm:$0xff] %v215
    // Predicated region
    $region38: #{tpu_custom_call.1} parent=1 // pred_check
      _
    $region39: #{tpu_custom_call.1} parent=1 // pred_check_branch
      %219 = sbr.rel (0) target = $region41
    $region40: #{tpu_custom_call.1} parent=1 // pred_region
      %221 = vsyncadd [#allocation4], 0
      %s223 = sshll.u32 [#allocation10], 4
      %s224 = int_to_ptr.vmem [resolvable:$true] %s223
      %s225 = sshll.u32 %s5, 4
      %s226 = int_to_ptr.hbm [resolvable:$true] %s225
      %228 = dma.vmem_to_hbm [thread:$0]  %s224, 128, %s226, [#allocation4]
    $region41: #{tpu_custom_call.1} parent=1 // pred_fallthru
      _
    // Predicated region
    $region42: #{tpu_custom_call.1} parent=1 // pred_check
      _
    $region43: #{tpu_custom_call.1} parent=1 // pred_check_branch
      %230 = sbr.rel (0) target = $region45
    $region44: #{tpu_custom_call.1} parent=1 // pred_region
      %232 = dma.done [#allocation4], 128
    $region45: #{tpu_custom_call.1} parent=1 // pred_fallthru
      _
    %233 = vsyncpa [#allocation3], 1
    %234 = vsyncpa [#allocation6], 1
    %235 = vsyncpa [#allocation9], 1
    %236 = vsyncpa [#allocation4], 1

</llo_original>
